<compile_context>
chip_gen: v7x
topology: tpu7x:2x2x1
jax: 0.10.0
libtpu: 0.0.40
codegen_flags: <defaults>
</compile_context>

<pallas_src>
import functools

import jax
import jax.numpy as jnp
from jax.experimental import pallas as pl
from jax.experimental.pallas import tpu as pltpu


# ----------------------------------------------------------------------------
# Fused kernel: normalize (lane-dense) -> 3x3 conv as a single K=32 im2col
# matmul (+bias, ReLU) -> GAP (sublane reduce, f32 1/HW) -> coefficient head.
#
#   xflat_ref   : (B, H*W*C)     raw cropped pixels, lane-dense flat slab, f32
#   patches_ref : (B*H*W, 32)    raw im2col patches (27 taps, zero-pad to 32), f32
#   sflat_ref   : (1, H*W*C)     per-lane affine scale for the flat slab, f32
#   oflat_ref   : (1, H*W*C)     per-lane affine offset for the flat slab, f32
#   sk_ref      : (1, 32)        per-lane affine scale for the patch block, f32
#   ok_ref      : (1, 32)        per-lane affine offset for the patch block, f32
#   wconv_ref   : (32, 128)      conv weights, tap-major / channel-minor, bf16
#   bconv_ref   : (1, 128)       conv bias (zero-padded lanes stay exactly 0), f32
#   wfc_ref     : (128, 128)     FC weights (zero-padded), bf16
#   bfc_ref     : (1, 128)       FC bias (zero-padded), f32
#   norm_ref    : (B, H*W*C)     output: normalized crop, lane-dense, f32
#   coeff_ref   : (B, 128)       output: coefficients (padded; sliced outside), f32
# ----------------------------------------------------------------------------
def _fused_forward_kernel(xflat_ref, patches_ref, sflat_ref, oflat_ref,
                          sk_ref, ok_ref, wconv_ref, bconv_ref, wfc_ref, bfc_ref,
                          norm_ref, coeff_ref):
    B = xflat_ref.shape[0]
    M = patches_ref.shape[0]
    CO = wconv_ref.shape[1]
    HW = M // B

    # 1) Affine normalization of the crop (f32 VPU, full 128-lane stores).
    norm_ref[...] = xflat_ref[...] * sflat_ref[...] + oflat_ref[...]

    # 2) Normalize the im2col patches (mean-valued halo lanes map to ~0, pad lanes
    #    to 0) and run the entire 3x3 conv as ONE K=32 MXU matmul, f32 accumulate.
    pn = patches_ref[...] * sk_ref[...] + ok_ref[...]                 # (M, 32) f32
    feat = jnp.dot(pn.astype(jnp.bfloat16), wconv_ref[...],
                   preferred_element_type=jnp.float32)                # (M, CO) f32
    feat = jnp.maximum(feat + bconv_ref[...], 0.0)                    # bias + ReLU

    # 3) Global average pool: sublane reduce (XLU) + 1/HW scale in f32.
    pooled = jnp.sum(feat.reshape(B, HW, CO), axis=1) * (1.0 / HW)    # (B, CO) f32

    # 4) Coefficient regression head.
    coeff_ref[...] = (jnp.dot(pooled.astype(jnp.bfloat16), wfc_ref[...],
                              preferred_element_type=jnp.float32)
                      + bfc_ref[...])                                 # (B, 128)


def fused_forward(x_flat, patches, scale_flat, offset_flat, scale_k, offset_k,
                  conv_w, conv_b, fc_w, fc_b):
    B, F = x_flat.shape
    NC = fc_w.shape[-1]
    vmem = pl.BlockSpec(memory_space=pltpu.MemorySpace.VMEM)   # whole array in VMEM
    return pl.pallas_call(
        _fused_forward_kernel,
        out_shape=(
            jax.ShapeDtypeStruct((B, F), jnp.float32),         # normalized crop slab
            jax.ShapeDtypeStruct((B, NC), jnp.float32),        # padded coefficients
        ),
        in_specs=[vmem] * 10,
        out_specs=(vmem, vmem),
    )(x_flat, patches, scale_flat, offset_flat, scale_k, offset_k,
      conv_w, conv_b, fc_w, fc_b)


# ----------------------------------------------------------------------------
# Wrapper glue (XLA): crop, layout prep, lane-dense im2col, parameter setup.
# ----------------------------------------------------------------------------
def center_crop_nchw_to_nhwc(x_nchw, pic_size):
    B, C, H, W = x_nchw.shape
    y0 = (H - pic_size) // 2
    x0 = (W - pic_size) // 2
    crop = x_nchw[:, :, y0:y0 + pic_size, x0:x0 + pic_size]
    return jnp.transpose(crop, (0, 2, 3, 1)).astype(jnp.float32)   # NHWC


class AnimateFromCoeffPallas:
    """Pallas stand-in for CustomAnimateFromCoeffWrapper's tensor hot path:
    crop -> normalize -> conv stem -> GAP -> coefficient regression.
    Returns (coefficients, normalized cropped image)."""

    CO_PAD = 128   # conv channels padded to a full 128-lane vreg / MXU width
    NC_PAD = 128   # coefficient head padded to a full 128-lane vreg
    K_PAD = 32     # im2col contraction (3*3*C = 27) padded to 32 lanes

    def __init__(self, *, in_ch=3, conv_ch=16, n_coeff=64, seed=0):
        assert conv_ch <= self.CO_PAD and n_coeff <= self.NC_PAD
        assert 9 * in_ch <= self.K_PAD
        self.in_ch, self.conv_ch, self.n_coeff = in_ch, conv_ch, n_coeff

        k = jax.random.PRNGKey(seed)
        k1, k2, k3, k4 = jax.random.split(k, 4)

        # TODO(synk): real Deep3DFaceRecon conv weights are OIHW; permute them to
        # (ky*kx, cin, cout) to match this tap-major / channel-minor layout.
        self.conv_w_raw = jax.random.normal(k1, (9, in_ch, conv_ch), jnp.float32) * 0.1
        self.conv_b_raw = jax.random.normal(k2, (conv_ch,), jnp.float32) * 0.01
        self.fc_w_raw = jax.random.normal(k3, (conv_ch, n_coeff), jnp.float32) * 0.1
        self.fc_b_raw = jax.random.normal(k4, (n_coeff,), jnp.float32) * 0.01

        # Zero-pad to full 128-lane MXU/vreg widths.  Results are unchanged: padded
        # conv-bias lanes are exactly 0 -> relu(0)=0 feeds zero FC rows; padded FC
        # columns are 0 and sliced off.  bf16 only at MXU operands, f32 biases.
        w27 = self.conv_w_raw.reshape(9 * in_ch, conv_ch)           # row = tap*C + c
        self.conv_w = (jnp.zeros((self.K_PAD, self.CO_PAD), jnp.float32)
                       .at[:9 * in_ch, :conv_ch].set(w27)
                       .astype(jnp.bfloat16))
        self.conv_b = (jnp.zeros((1, self.CO_PAD), jnp.float32)
                       .at[0, :conv_ch].set(self.conv_b_raw))
        self.fc_w = (jnp.zeros((self.CO_PAD, self.NC_PAD), jnp.float32)
                     .at[:conv_ch, :n_coeff].set(self.fc_w_raw)
                     .astype(jnp.bfloat16))
        self.fc_b = (jnp.zeros((1, self.NC_PAD), jnp.float32)
                     .at[0, :n_coeff].set(self.fc_b_raw))

        # Deep3DFaceRecon-style normalization folded into per-channel scale/offset:
        # x*scale + offset == (x/255 - mean)/std.
        self.mean_c = jnp.full((in_ch,), 0.5, jnp.float32)
        self.std_c = jnp.full((in_ch,), 0.5, jnp.float32)
        self.scale_c = 1.0 / (255.0 * self.std_c)
        self.offset_c = -self.mean_c / self.std_c
        self.pad_raw_c = 255.0 * self.mean_c    # raw halo value that normalizes to 0

        # Per-lane affine constants for the (M, 32) im2col block (pad lanes -> 0).
        sk = jnp.zeros((self.K_PAD,), jnp.float32).at[:9 * in_ch].set(
            jnp.tile(self.scale_c, 9))
        ok = jnp.zeros((self.K_PAD,), jnp.float32).at[:9 * in_ch].set(
            jnp.tile(self.offset_c, 9))
        self.scale_k = sk.reshape(1, self.K_PAD)
        self.offset_k = ok.reshape(1, self.K_PAD)

    @functools.partial(jax.jit, static_argnums=(0, 2))
    def generate(self, x_nchw, pic_size=16):
        # TODO(synk): face detection / landmark alignment, the face-render network,
        # enhancer and ffmpeg muxing of AnimateFromCoeff.generate() are file/IO
        # based with no tensor equivalent; a center crop stands in for the face crop.
        B = x_nchw.shape[0]
        C = self.in_ch
        crop = center_crop_nchw_to_nhwc(x_nchw, pic_size)          # (B, H, W, C)
        H = W = pic_size

        # Lane-dense flat slab + per-lane affine constants for the normalize path.
        x_flat = crop.reshape(B, H * W * C)                        # (B, 768)
        scale_flat = jnp.tile(self.scale_c, H * W).reshape(1, H * W * C)
        offset_flat = jnp.tile(self.offset_c, H * W).reshape(1, H * W * C)

        # Raw padded image: halo = 255*mean so the in-kernel affine maps it to ~0,
        # which realises the conv's zero padding in normalized space.
        xp = (jnp.zeros((B, H + 2, W + 2, C), jnp.float32)
              + self.pad_raw_c.reshape(1, 1, 1, C))
        xp = xp.at[:, 1:H + 1, 1:W + 1, :].set(crop)

        # Lane-dense im2col of the raw padded image (XLA side, ~64 KiB at this
        # size): column = tap*C + c, taps ordered (di, dj) row-major.
        cols = [xp[:, di:di + H, dj:dj + W, :]
                for di in range(3) for dj in range(3)]
        patches = jnp.concatenate(cols, axis=-1).reshape(B * H * W, 9 * C)
        patches = jnp.pad(patches, ((0, 0), (0, self.K_PAD - 9 * C)))

        norm_flat, coeff_pad = fused_forward(
            x_flat, patches, scale_flat, offset_flat,
            self.scale_k, self.offset_k,
            self.conv_w, self.conv_b, self.fc_w, self.fc_b)
        return coeff_pad[:, :self.n_coeff], norm_flat.reshape(B, H, W, C)

    def __call__(self, x_nchw, pic_size=16):
        return self.generate(x_nchw, pic_size)

    # Pure-JAX f32 reference of the same forward pass (for tolerance checks).
    def reference(self, x_nchw, pic_size=16):
        crop = center_crop_nchw_to_nhwc(x_nchw, pic_size)
        mean = self.mean_c.reshape(1, 1, 1, -1)
        std = self.std_c.reshape(1, 1, 1, -1)
        norm = (crop / 255.0 - mean) / std
        w_hwio = self.conv_w_raw.reshape(3, 3, self.in_ch, self.conv_ch)
        conv = jax.lax.conv_general_dilated(
            norm, w_hwio, window_strides=(1, 1), padding="SAME",
            dimension_numbers=("NHWC", "HWIO", "NHWC")) + self.conv_b_raw
        feat = jnp.maximum(conv, 0.0)
        pooled = feat.mean(axis=(1, 2))
        coeffs = pooled @ self.fc_w_raw + self.fc_b_raw
        return coeffs, norm


if __name__ == "__main__":
    key = jax.random.PRNGKey(0)
    # synthetic "source image" batch, PyTorch NCHW uint8-range floats
    x = jax.random.uniform(key, (2, 3, 32, 32), jnp.float32, 0.0, 255.0)

    model = AnimateFromCoeffPallas(in_ch=3, conv_ch=16, n_coeff=64, seed=0)
    coeffs, norm_img = model(x, pic_size=16)
    jax.block_until_ready((coeffs, norm_img))

    assert coeffs.shape == (2, 64)
    assert norm_img.shape == (2, 16, 16, 3)
    assert jnp.all(jnp.isfinite(coeffs))
    assert jnp.all(jnp.isfinite(norm_img))

    # f32 reference; bf16 MXU operands -> loose tolerance on the coefficients.
    ref_coeffs, ref_norm = model.reference(x, pic_size=16)
    assert jnp.allclose(norm_img, ref_norm, atol=1e-4)
    assert jnp.allclose(coeffs, ref_coeffs, atol=3e-2)
    print("KERNEL_OK")
</pallas_src>

<mosaic_0001>
module attributes {stable_mosaic.version = 11 : i64} {
  func.func @_fused_forward_kernel(%arg0: memref<2x768xf32, #tpu.memory_space<vmem>>, %arg1: memref<512x32xf32, #tpu.memory_space<vmem>>, %arg2: memref<1x768xf32, #tpu.memory_space<vmem>>, %arg3: memref<1x768xf32, #tpu.memory_space<vmem>>, %arg4: memref<1x32xf32, #tpu.memory_space<vmem>>, %arg5: memref<1x32xf32, #tpu.memory_space<vmem>>, %arg6: memref<32x128xbf16, #tpu.memory_space<vmem>>, %arg7: memref<1x128xf32, #tpu.memory_space<vmem>>, %arg8: memref<128x128xbf16, #tpu.memory_space<vmem>>, %arg9: memref<1x128xf32, #tpu.memory_space<vmem>>, %arg10: memref<2x768xf32, #tpu.memory_space<vmem>>, %arg11: memref<2x128xf32, #tpu.memory_space<vmem>>) attributes {dimension_semantics = [], scalar_prefetch = 0 : i64, scratch_operands = 0 : i64, tpu.core_type = #tpu.core_type<tc>} {
    %c0 = arith.constant 0 : index
    %c0_0 = arith.constant 0 : index
    %0 = vector.load %arg0[%c0, %c0_0] : memref<2x768xf32, #tpu.memory_space<vmem>>, vector<2x768xf32>
    %c0_1 = arith.constant 0 : index
    %c0_2 = arith.constant 0 : index
    %1 = vector.load %arg2[%c0_1, %c0_2] : memref<1x768xf32, #tpu.memory_space<vmem>>, vector<1x768xf32>
    %2 = vector.broadcast %1 : vector<1x768xf32> to vector<2x768xf32>
    %3 = arith.mulf %0, %2 : vector<2x768xf32>
    %c0_3 = arith.constant 0 : index
    %c0_4 = arith.constant 0 : index
    %4 = vector.load %arg3[%c0_3, %c0_4] : memref<1x768xf32, #tpu.memory_space<vmem>>, vector<1x768xf32>
    %5 = vector.broadcast %4 : vector<1x768xf32> to vector<2x768xf32>
    %6 = arith.addf %3, %5 : vector<2x768xf32>
    %c0_5 = arith.constant 0 : index
    %c0_6 = arith.constant 0 : index
    %7 = vector.load %arg10[%c0_5, %c0_6] : memref<2x768xf32, #tpu.memory_space<vmem>>, vector<2x768xf32>
    tpu.vector_store %arg10[%c0_5, %c0_6], %6 {strides = array<i32>} : memref<2x768xf32, #tpu.memory_space<vmem>>, vector<2x768xf32>,
    %c0_7 = arith.constant 0 : index
    %c0_8 = arith.constant 0 : index
    %8 = vector.load %arg1[%c0_7, %c0_8] : memref<512x32xf32, #tpu.memory_space<vmem>>, vector<512x32xf32>
    %c0_9 = arith.constant 0 : index
    %c0_10 = arith.constant 0 : index
    %9 = vector.load %arg4[%c0_9, %c0_10] : memref<1x32xf32, #tpu.memory_space<vmem>>, vector<1x32xf32>
    %10 = vector.broadcast %9 : vector<1x32xf32> to vector<512x32xf32>
    %11 = arith.mulf %8, %10 : vector<512x32xf32>
    %c0_11 = arith.constant 0 : index
    %c0_12 = arith.constant 0 : index
    %12 = vector.load %arg5[%c0_11, %c0_12] : memref<1x32xf32, #tpu.memory_space<vmem>>, vector<1x32xf32>
    %13 = vector.broadcast %12 : vector<1x32xf32> to vector<512x32xf32>
    %14 = arith.addf %11, %13 : vector<512x32xf32>
    %15 = arith.truncf %14 : vector<512x32xf32> to vector<512x32xbf16>
    %c0_13 = arith.constant 0 : index
    %c0_14 = arith.constant 0 : index
    %16 = vector.load %arg6[%c0_13, %c0_14] : memref<32x128xbf16, #tpu.memory_space<vmem>>, vector<32x128xbf16>
    %cst = arith.constant dense<0.000000e+00> : vector<512x128xf32>
    %17 = tpu.matmul %15, %16, %cst {dimension_numbers = #tpu.dot_dimension_numbers<[1], [0], [0], [1], [0, 0, 1, 1], [], []>} : vector<512x32xbf16>, vector<32x128xbf16>, vector<512x128xf32> -> vector<512x128xf32>
    %c0_15 = arith.constant 0 : index
    %c0_16 = arith.constant 0 : index
    %18 = vector.load %arg7[%c0_15, %c0_16] : memref<1x128xf32, #tpu.memory_space<vmem>>, vector<1x128xf32>
    %19 = vector.broadcast %18 : vector<1x128xf32> to vector<512x128xf32>
    %20 = arith.addf %17, %19 : vector<512x128xf32>
    %cst_17 = arith.constant 0.000000e+00 : f32
    %21 = vector.broadcast %cst_17 : f32 to vector<512x128xf32>
    %22 = arith.maximumf %20, %21 : vector<512x128xf32>
    %23 = vector.shape_cast %22 : vector<512x128xf32> to vector<2x256x128xf32>
    %cst_18 = arith.constant dense<0.000000e+00> : vector<2x128xf32>
    %24 = vector.multi_reduction <add>, %23, %cst_18 [1] : vector<2x256x128xf32> to vector<2x128xf32>
    %cst_19 = arith.constant 3.906250e-03 : f32
    %25 = vector.broadcast %cst_19 : f32 to vector<2x128xf32>
    %26 = arith.mulf %24, %25 : vector<2x128xf32>
    %27 = arith.truncf %26 : vector<2x128xf32> to vector<2x128xbf16>
    %c0_20 = arith.constant 0 : index
    %c0_21 = arith.constant 0 : index
    %28 = vector.load %arg8[%c0_20, %c0_21] : memref<128x128xbf16, #tpu.memory_space<vmem>>, vector<128x128xbf16>
    %cst_22 = arith.constant dense<0.000000e+00> : vector<2x128xf32>
    %29 = tpu.matmul %27, %28, %cst_22 {dimension_numbers = #tpu.dot_dimension_numbers<[1], [0], [0], [1], [0, 0, 1, 1], [], []>} : vector<2x128xbf16>, vector<128x128xbf16>, vector<2x128xf32> -> vector<2x128xf32>
    %c0_23 = arith.constant 0 : index
    %c0_24 = arith.constant 0 : index
    %30 = vector.load %arg9[%c0_23, %c0_24] : memref<1x128xf32, #tpu.memory_space<vmem>>, vector<1x128xf32>
    %31 = vector.broadcast %30 : vector<1x128xf32> to vector<2x128xf32>
    %32 = arith.addf %29, %31 : vector<2x128xf32>
    %c0_25 = arith.constant 0 : index
    %c0_26 = arith.constant 0 : index
    %33 = vector.load %arg11[%c0_25, %c0_26] : memref<2x128xf32, #tpu.memory_space<vmem>>, vector<2x128xf32>
    tpu.vector_store %arg11[%c0_25, %c0_26], %32 {strides = array<i32>} : memref<2x128xf32, #tpu.memory_space<vmem>>, vector<2x128xf32>,
    return
  }
}

</mosaic_0001>

<llo_original>
// kernel: tile.2
$region0: #{tile.2}
  #allocation0 [shape = 's32[1]{0}', space=sflag, size = 0x4, scoped, tag = 'scoped memory for tile.2']
  %s0 = inlined_call_operand.<no memory space> [shape: f32[], index: 0, kind: input, shape index: {}]
  %s1 = inlined_call_operand.vmem [shape: f32[1,768], index: 1, kind: output, shape index: {}]
  %v2 = vstv %s0
  %3 = vst [vmem:[%s1] sm:$0x1] %v2
  %s4 = scalar_lea.vmem %s1, 1
  %5 = vst [vmem:[%s4] sm:$0x1] %v2
  %s6 = scalar_lea.vmem %s1, 2
  %7 = vst [vmem:[%s6] sm:$0x1] %v2
  %s8 = scalar_lea.vmem %s1, 3
  %9 = vst [vmem:[%s8] sm:$0x1] %v2
  %s10 = scalar_lea.vmem %s1, 4
  %11 = vst [vmem:[%s10] sm:$0x1] %v2
  %s12 = scalar_lea.vmem %s1, 5
  %13 = vst [vmem:[%s12] sm:$0x1] %v2

// kernel: generate.1
$region0: #{generate.1}
  #allocation0 [shape = 'u32[]', space=smem, size = 0x4, offset = 0x4, fixed_abs, tag = 'smem constant byte address 0x4 - core index']
  #allocation1 [shape = 'u32[144,128]{1,0:T(1,128)}', space=vmem, size = 0x12000, scoped, tag = 'internal scratch']
  %s0 = inlined_call_operand.vmem [shape: f32[2,768], index: 0, kind: input, shape index: {}]
  %s1 = inlined_call_operand.vmem [shape: f32[512,32], index: 1, kind: input, shape index: {}]
  %s2 = inlined_call_operand.vmem [shape: f32[1,768], index: 2, kind: input, shape index: {}]
  %s3 = inlined_call_operand.vmem [shape: f32[1,768], index: 3, kind: input, shape index: {}]
  %s4 = inlined_call_operand.vmem [shape: f32[1,32], index: 4, kind: input, shape index: {}]
  %s5 = inlined_call_operand.vmem [shape: f32[1,32], index: 5, kind: input, shape index: {}]
  %s6 = inlined_call_operand.vmem [shape: bf16[32,128], index: 6, kind: input, shape index: {}]
  %s7 = inlined_call_operand.vmem [shape: f32[1,128], index: 7, kind: input, shape index: {}]
  %s8 = inlined_call_operand.vmem [shape: bf16[128,128], index: 8, kind: input, shape index: {}]
  %s9 = inlined_call_operand.vmem [shape: f32[1,128], index: 9, kind: input, shape index: {}]
  %s10 = inlined_call_operand.vmem [shape: f32[2,768], index: 10, kind: output, shape index: {0}]
  %s11 = inlined_call_operand.hbm [shape: f32[2,128], index: 11, kind: output, shape index: {1}]
  %12 = xla_tuple %s10, %s11
  %s13 = sld [smem:[#allocation0]]
  $region58: #{generate.1} parent=0
    _
  %s15 = ssub.s32 1, %s13
  %s16 = scalar_select 0, %s15, %s13
  $region1: #{generate.1} parent=0
    #allocation2 [shape = 'u8[1024]{0}', space=vmem, size = 0x400, scoped, tag = 'output window, operand 1, single buffered']
    #allocation3 [shape = 's32[1]{0}', space=sflag, size = 0x4, scoped, tag = 'scoped memory for generate.1']
    %17 = vsyncpa [#allocation3], 0
    // Predicated region
    $region2: #{generate.1} parent=1 // pred_check
      _
    $region3: #{generate.1} parent=1 // pred_check_branch
      %19 = sbr.rel (0) target = $region5
    $region4: #{generate.1} parent=1 // pred_region
      _
    $region5: #{generate.1} parent=1 // pred_fallthru
      _
    // Predicated region
    $region6: #{generate.1} parent=1 // pred_check
      _
    $region7: #{generate.1} parent=1 // pred_check_branch
      %21 = sbr.rel (0) target = $region9
    $region8: #{generate.1} parent=1 // pred_region
      _
    $region9: #{generate.1} parent=1 // pred_fallthru
      _
    // Predicated region
    $region10: #{generate.1} parent=1 // pred_check
      _
    $region11: #{generate.1} parent=1 // pred_check_branch
      %23 = sbr.rel (0) target = $region13
    $region12: #{generate.1} parent=1 // pred_region
      _
    $region13: #{generate.1} parent=1 // pred_fallthru
      _
    // Predicated region
    $region14: #{generate.1} parent=1 // pred_check
      _
    $region15: #{generate.1} parent=1 // pred_check_branch
      %25 = sbr.rel (0) target = $region17
    $region16: #{generate.1} parent=1 // pred_region
      _
    $region17: #{generate.1} parent=1 // pred_fallthru
      _
    // Predicated region
    $region18: #{generate.1} parent=1 // pred_check
      _
    $region19: #{generate.1} parent=1 // pred_check_branch
      %27 = sbr.rel (0) target = $region21
    $region20: #{generate.1} parent=1 // pred_region
      _
    $region21: #{generate.1} parent=1 // pred_fallthru
      _
    // Predicated region
    $region22: #{generate.1} parent=1 // pred_check
      _
    $region23: #{generate.1} parent=1 // pred_check_branch
      %29 = sbr.rel (0) target = $region25
    $region24: #{generate.1} parent=1 // pred_region
      _
    $region25: #{generate.1} parent=1 // pred_fallthru
      _
    // Predicated region
    $region26: #{generate.1} parent=1 // pred_check
      _
    $region27: #{generate.1} parent=1 // pred_check_branch
      %31 = sbr.rel (0) target = $region29
    $region28: #{generate.1} parent=1 // pred_region
      _
    $region29: #{generate.1} parent=1 // pred_fallthru
      _
    // Predicated region
    $region30: #{generate.1} parent=1 // pred_check
      _
    $region31: #{generate.1} parent=1 // pred_check_branch
      %33 = sbr.rel (0) target = $region33
    $region32: #{generate.1} parent=1 // pred_region
      _
    $region33: #{generate.1} parent=1 // pred_fallthru
      _
    // Predicated region
    $region34: #{generate.1} parent=1 // pred_check
      _
    $region35: #{generate.1} parent=1 // pred_check_branch
      %35 = sbr.rel (0) target = $region37
    $region36: #{generate.1} parent=1 // pred_region
      _
    $region37: #{generate.1} parent=1 // pred_fallthru
      _
    // Predicated region
    $region38: #{generate.1} parent=1 // pred_check
      _
    $region39: #{generate.1} parent=1 // pred_check_branch
      %37 = sbr.rel (0) target = $region41
    $region40: #{generate.1} parent=1 // pred_region
      _
    $region41: #{generate.1} parent=1 // pred_fallthru
      _
    %v39 = vld [vmem:[%s0] sm:$0xff]
    %v40 = vld [vmem:[%s0 + $0x8] sm:$0xf]
    %v41 = vld [vmem:[%s2] sm:$0x3f]
    %v43 = vlaneseq
    %v44 = vshrl.u32 %v43, 7
    %v45 = vsub.s32 0, %v44
    %v46 = vrot.slane %v41, %v45
    %v47 = vlaneseq
    %v48 = vshrl.u32 %v47, 7
    %v49 = vsub.s32 1, %v48
    %v50 = vrot.slane %v41, %v49
    %v51 = vlaneseq
    %v52 = vshrl.u32 %v51, 7
    %v53 = vsub.s32 2, %v52
    %v54 = vrot.slane %v41, %v53
    %v55 = vlaneseq
    %v56 = vshrl.u32 %v55, 7
    %v57 = vsub.s32 3, %v56
    %v58 = vrot.slane %v41, %v57
    %v59 = vlaneseq
    %v60 = vshrl.u32 %v59, 7
    %v61 = vsub.s32 4, %v60
    %v62 = vrot.slane %v41, %v61
    %v63 = vlaneseq
    %v64 = vshrl.u32 %v63, 7
    %v65 = vsub.s32 5, %v64
    %v66 = vrot.slane %v41, %v65
    %v67 = vcombine.low %v46, %v50
    %v68 = vcombine.low %v54, %v58
    %v70 = vunpack.c.l.s4 1983009808
    %v71 = vunpack.c.0.s8 %v70
    %v72 = vlaneseq
    %v73 = vshrl.u32 %v72, 7
    %v74 = vsub.s32 %v71, %v73
    %v75 = vrot.slane %v67, %v74
    %v77 = vunpack.c.l.s4 1983009808
    %v78 = vunpack.c.0.s8 %v77
    %v79 = vlaneseq
    %v80 = vshrl.u32 %v79, 7
    %v81 = vsub.s32 %v78, %v80
    %v82 = vrot.slane %v68, %v81
    %v83 = vcombine.low %v75, %v82
    %v84 = vcombine.low %v62, %v66
    %v86 = vunpack.c.l.s4 1983009808
    %v87 = vunpack.c.0.s8 %v86
    %v88 = vlaneseq
    %v89 = vshrl.u32 %v88, 7
    %v90 = vsub.s32 %v87, %v89
    %v91 = vrot.slane %v84, %v90
    %v94 = vmul.f32 %v39, %v83
    %v95 = vmul.f32 %v40, %v91
    %v96 = vld [vmem:[%s3] sm:$0x3f]
    %v98 = vlaneseq
    %v99 = vshrl.u32 %v98, 7
    %v100 = vsub.s32 0, %v99
    %v101 = vrot.slane %v96, %v100
    %v102 = vlaneseq
    %v103 = vshrl.u32 %v102, 7
    %v104 = vsub.s32 1, %v103
    %v105 = vrot.slane %v96, %v104
    %v106 = vlaneseq
    %v107 = vshrl.u32 %v106, 7
    %v108 = vsub.s32 2, %v107
    %v109 = vrot.slane %v96, %v108
    %v110 = vlaneseq
    %v111 = vshrl.u32 %v110, 7
    %v112 = vsub.s32 3, %v111
    %v113 = vrot.slane %v96, %v112
    %v114 = vlaneseq
    %v115 = vshrl.u32 %v114, 7
    %v116 = vsub.s32 4, %v115
    %v117 = vrot.slane %v96, %v116
    %v118 = vlaneseq
    %v119 = vshrl.u32 %v118, 7
    %v120 = vsub.s32 5, %v119
    %v121 = vrot.slane %v96, %v120
    %v122 = vcombine.low %v101, %v105
    %v123 = vcombine.low %v109, %v113
    %v125 = vunpack.c.l.s4 1983009808
    %v126 = vunpack.c.0.s8 %v125
    %v127 = vlaneseq
    %v128 = vshrl.u32 %v127, 7
    %v129 = vsub.s32 %v126, %v128
    %v130 = vrot.slane %v122, %v129
    %v132 = vunpack.c.l.s4 1983009808
    %v133 = vunpack.c.0.s8 %v132
    %v134 = vlaneseq
    %v135 = vshrl.u32 %v134, 7
    %v136 = vsub.s32 %v133, %v135
    %v137 = vrot.slane %v123, %v136
    %v138 = vcombine.low %v130, %v137
    %v139 = vcombine.low %v117, %v121
    %v141 = vunpack.c.l.s4 1983009808
    %v142 = vunpack.c.0.s8 %v141
    %v143 = vlaneseq
    %v144 = vshrl.u32 %v143, 7
    %v145 = vsub.s32 %v142, %v144
    %v146 = vrot.slane %v139, %v145
    %v149 = vadd.f32 %v94, %v138
    %v150 = vadd.f32 %v95, %v146
    %151 = vst [vmem:[%s10] sm:$0xff] %v149
    %152 = vst [vmem:[%s10 + $0x8] sm:$0xf] %v150
    %v153 = vld [vmem:[%s1] sm:$0xff]
    %v154 = vld [vmem:[%s1 + $0x8] sm:$0xff]
    %v155 = vld [vmem:[%s1 + $0x10] sm:$0xff]
    %v156 = vld [vmem:[%s1 + $0x18] sm:$0xff]
    %v157 = vld [vmem:[%s1 + $0x20] sm:$0xff]
    %v158 = vld [vmem:[%s1 + $0x28] sm:$0xff]
    %v159 = vld [vmem:[%s1 + $0x30] sm:$0xff]
    %v160 = vld [vmem:[%s1 + $0x38] sm:$0xff]
    %v161 = vld [vmem:[%s1 + $0x40] sm:$0xff]
    %v162 = vld [vmem:[%s1 + $0x48] sm:$0xff]
    %v163 = vld [vmem:[%s1 + $0x50] sm:$0xff]
    %v164 = vld [vmem:[%s1 + $0x58] sm:$0xff]
    %v165 = vld [vmem:[%s1 + $0x60] sm:$0xff]
    %v166 = vld [vmem:[%s1 + $0x68] sm:$0xff]
    %v167 = vld [vmem:[%s1 + $0x70] sm:$0xff]
    %v168 = vld [vmem:[%s1 + $0x78] sm:$0xff]
    %v169 = vld [vmem:[%s1 + $0x80] sm:$0xff]
    %v170 = vld [vmem:[%s1 + $0x88] sm:$0xff]
    %v171 = vld [vmem:[%s1 + $0x90] sm:$0xff]
    %v172 = vld [vmem:[%s1 + $0x98] sm:$0xff]
    %v173 = vld [vmem:[%s1 + $0xa0] sm:$0xff]
    %v174 = vld [vmem:[%s1 + $0xa8] sm:$0xff]
    %v175 = vld [vmem:[%s1 + $0xb0] sm:$0xff]
    %v176 = vld [vmem:[%s1 + $0xb8] sm:$0xff]
    %v177 = vld [vmem:[%s1 + $0xc0] sm:$0xff]
    %v178 = vld [vmem:[%s1 + $0xc8] sm:$0xff]
    %v179 = vld [vmem:[%s1 + $0xd0] sm:$0xff]
    %v180 = vld [vmem:[%s1 + $0xd8] sm:$0xff]
    %v181 = vld [vmem:[%s1 + $0xe0] sm:$0xff]
    %v182 = vld [vmem:[%s1 + $0xe8] sm:$0xff]
    %v183 = vld [vmem:[%s1 + $0xf0] sm:$0xff]
    %v184 = vld [vmem:[%s1 + $0xf8] sm:$0xff]
    %v185 = vld [vmem:[%s1 + $0x100] sm:$0xff]
    %v186 = vld [vmem:[%s1 + $0x108] sm:$0xff]
    %v187 = vld [vmem:[%s1 + $0x110] sm:$0xff]
    %v188 = vld [vmem:[%s1 + $0x118] sm:$0xff]
    %v189 = vld [vmem:[%s1 + $0x120] sm:$0xff]
    %v190 = vld [vmem:[%s1 + $0x128] sm:$0xff]
    %v191 = vld [vmem:[%s1 + $0x130] sm:$0xff]
    %v192 = vld [vmem:[%s1 + $0x138] sm:$0xff]
    %v193 = vld [vmem:[%s1 + $0x140] sm:$0xff]
    %v194 = vld [vmem:[%s1 + $0x148] sm:$0xff]
    %v195 = vld [vmem:[%s1 + $0x150] sm:$0xff]
    %v196 = vld [vmem:[%s1 + $0x158] sm:$0xff]
    %v197 = vld [vmem:[%s1 + $0x160] sm:$0xff]
    %v198 = vld [vmem:[%s1 + $0x168] sm:$0xff]
    %v199 = vld [vmem:[%s1 + $0x170] sm:$0xff]
    %v200 = vld [vmem:[%s1 + $0x178] sm:$0xff]
    %v201 = vld [vmem:[%s1 + $0x180] sm:$0xff]
    %v202 = vld [vmem:[%s1 + $0x188] sm:$0xff]
    %v203 = vld [vmem:[%s1 + $0x190] sm:$0xff]
    %v204 = vld [vmem:[%s1 + $0x198] sm:$0xff]
    %v205 = vld [vmem:[%s1 + $0x1a0] sm:$0xff]
    %v206 = vld [vmem:[%s1 + $0x1a8] sm:$0xff]
    %v207 = vld [vmem:[%s1 + $0x1b0] sm:$0xff]
    %v208 = vld [vmem:[%s1 + $0x1b8] sm:$0xff]
    %v209 = vld [vmem:[%s1 + $0x1c0] sm:$0xff]
    %v210 = vld [vmem:[%s1 + $0x1c8] sm:$0xff]
    %v211 = vld [vmem:[%s1 + $0x1d0] sm:$0xff]
    %v212 = vld [vmem:[%s1 + $0x1d8] sm:$0xff]
    %v213 = vld [vmem:[%s1 + $0x1e0] sm:$0xff]
    %v214 = vld [vmem:[%s1 + $0x1e8] sm:$0xff]
    %v215 = vld [vmem:[%s1 + $0x1f0] sm:$0xff]
    %v216 = vld [vmem:[%s1 + $0x1f8] sm:$0xff]
    %v217 = vld [vmem:[%s4] sm:$0x1]
    %v219 = vlaneseq
    %v220 = vshrl.u32 %v219, 7
    %v221 = vsub.s32 0, %v220
    %v222 = vrot.slane %v217, %v221
    %v224 = vmul.f32 %v153, %v222
    %v225 = vmul.f32 %v154, %v222
    %v226 = vmul.f32 %v155, %v222
    %v227 = vmul.f32 %v156, %v222
    %v228 = vmul.f32 %v157, %v222
    %v229 = vmul.f32 %v158, %v222
    %v230 = vmul.f32 %v159, %v222
    %v231 = vmul.f32 %v160, %v222
    %v232 = vmul.f32 %v161, %v222
    %v233 = vmul.f32 %v162, %v222
    %v234 = vmul.f32 %v163, %v222
    %v235 = vmul.f32 %v164, %v222
    %v236 = vmul.f32 %v165, %v222
    %v237 = vmul.f32 %v166, %v222
    %v238 = vmul.f32 %v167, %v222
    %v239 = vmul.f32 %v168, %v222
    %v240 = vmul.f32 %v169, %v222
    %v241 = vmul.f32 %v170, %v222
    %v242 = vmul.f32 %v171, %v222
    %v243 = vmul.f32 %v172, %v222
    %v244 = vmul.f32 %v173, %v222
    %v245 = vmul.f32 %v174, %v222
    %v246 = vmul.f32 %v175, %v222
    %v247 = vmul.f32 %v176, %v222
    %v248 = vmul.f32 %v177, %v222
    %v249 = vmul.f32 %v178, %v222
    %v250 = vmul.f32 %v179, %v222
    %v251 = vmul.f32 %v180, %v222
    %v252 = vmul.f32 %v181, %v222
    %v253 = vmul.f32 %v182, %v222
    %v254 = vmul.f32 %v183, %v222
    %v255 = vmul.f32 %v184, %v222
    %v256 = vmul.f32 %v185, %v222
    %v257 = vmul.f32 %v186, %v222
    %v258 = vmul.f32 %v187, %v222
    %v259 = vmul.f32 %v188, %v222
    %v260 = vmul.f32 %v189, %v222
    %v261 = vmul.f32 %v190, %v222
    %v262 = vmul.f32 %v191, %v222
    %v263 = vmul.f32 %v192, %v222
    %v264 = vmul.f32 %v193, %v222
    %v265 = vmul.f32 %v194, %v222
    %v266 = vmul.f32 %v195, %v222
    %v267 = vmul.f32 %v196, %v222
    %v268 = vmul.f32 %v197, %v222
    %v269 = vmul.f32 %v198, %v222
    %v270 = vmul.f32 %v199, %v222
    %v271 = vmul.f32 %v200, %v222
    %v272 = vmul.f32 %v201, %v222
    %v273 = vmul.f32 %v202, %v222
    %v274 = vmul.f32 %v203, %v222
    %v275 = vmul.f32 %v204, %v222
    %v276 = vmul.f32 %v205, %v222
    %v277 = vmul.f32 %v206, %v222
    %v278 = vmul.f32 %v207, %v222
    %v279 = vmul.f32 %v208, %v222
    %v280 = vmul.f32 %v209, %v222
    %v281 = vmul.f32 %v210, %v222
    %v282 = vmul.f32 %v211, %v222
    %v283 = vmul.f32 %v212, %v222
    %v284 = vmul.f32 %v213, %v222
    %v285 = vmul.f32 %v214, %v222
    %v286 = vmul.f32 %v215, %v222
    %v287 = vmul.f32 %v216, %v222
    %v288 = vld [vmem:[%s5] sm:$0x1]
    %v290 = vlaneseq
    %v291 = vshrl.u32 %v290, 7
    %v292 = vsub.s32 0, %v291
    %v293 = vrot.slane %v288, %v292
    %v295 = vadd.f32 %v224, %v293
    %v296 = vadd.f32 %v225, %v293
    %v297 = vadd.f32 %v226, %v293
    %v298 = vadd.f32 %v227, %v293
    %v299 = vadd.f32 %v228, %v293
    %v300 = vadd.f32 %v229, %v293
    %v301 = vadd.f32 %v230, %v293
    %v302 = vadd.f32 %v231, %v293
    %v303 = vadd.f32 %v232, %v293
    %v304 = vadd.f32 %v233, %v293
    %v305 = vadd.f32 %v234, %v293
    %v306 = vadd.f32 %v235, %v293
    %v307 = vadd.f32 %v236, %v293
    %v308 = vadd.f32 %v237, %v293
    %v309 = vadd.f32 %v238, %v293
    %v310 = vadd.f32 %v239, %v293
    %v311 = vadd.f32 %v240, %v293
    %v312 = vadd.f32 %v241, %v293
    %v313 = vadd.f32 %v242, %v293
    %v314 = vadd.f32 %v243, %v293
    %v315 = vadd.f32 %v244, %v293
    %v316 = vadd.f32 %v245, %v293
    %v317 = vadd.f32 %v246, %v293
    %v318 = vadd.f32 %v247, %v293
    %v319 = vadd.f32 %v248, %v293
    %v320 = vadd.f32 %v249, %v293
    %v321 = vadd.f32 %v250, %v293
    %v322 = vadd.f32 %v251, %v293
    %v323 = vadd.f32 %v252, %v293
    %v324 = vadd.f32 %v253, %v293
    %v325 = vadd.f32 %v254, %v293
    %v326 = vadd.f32 %v255, %v293
    %v327 = vadd.f32 %v256, %v293
    %v328 = vadd.f32 %v257, %v293
    %v329 = vadd.f32 %v258, %v293
    %v330 = vadd.f32 %v259, %v293
    %v331 = vadd.f32 %v260, %v293
    %v332 = vadd.f32 %v261, %v293
    %v333 = vadd.f32 %v262, %v293
    %v334 = vadd.f32 %v263, %v293
    %v335 = vadd.f32 %v264, %v293
    %v336 = vadd.f32 %v265, %v293
    %v337 = vadd.f32 %v266, %v293
    %v338 = vadd.f32 %v267, %v293
    %v339 = vadd.f32 %v268, %v293
    %v340 = vadd.f32 %v269, %v293
    %v341 = vadd.f32 %v270, %v293
    %v342 = vadd.f32 %v271, %v293
    %v343 = vadd.f32 %v272, %v293
    %v344 = vadd.f32 %v273, %v293
    %v345 = vadd.f32 %v274, %v293
    %v346 = vadd.f32 %v275, %v293
    %v347 = vadd.f32 %v276, %v293
    %v348 = vadd.f32 %v277, %v293
    %v349 = vadd.f32 %v278, %v293
    %v350 = vadd.f32 %v279, %v293
    %v351 = vadd.f32 %v280, %v293
    %v352 = vadd.f32 %v281, %v293
    %v353 = vadd.f32 %v282, %v293
    %v354 = vadd.f32 %v283, %v293
    %v355 = vadd.f32 %v284, %v293
    %v356 = vadd.f32 %v285, %v293
    %v357 = vadd.f32 %v286, %v293
    %v358 = vadd.f32 %v287, %v293
    %v359 = vpack.c.bf16 %v296, %v295
    %v360 = vpack.c.bf16 %v298, %v297
    %v361 = vpack.c.bf16 %v300, %v299
    %v362 = vpack.c.bf16 %v302, %v301
    %v363 = vpack.c.bf16 %v304, %v303
    %v364 = vpack.c.bf16 %v306, %v305
    %v365 = vpack.c.bf16 %v308, %v307
    %v366 = vpack.c.bf16 %v310, %v309
    %v367 = vpack.c.bf16 %v312, %v311
    %v368 = vpack.c.bf16 %v314, %v313
    %v369 = vpack.c.bf16 %v316, %v315
    %v370 = vpack.c.bf16 %v318, %v317
    %v371 = vpack.c.bf16 %v320, %v319
    %v372 = vpack.c.bf16 %v322, %v321
    %v373 = vpack.c.bf16 %v324, %v323
    %v374 = vpack.c.bf16 %v326, %v325
    %v375 = vpack.c.bf16 %v328, %v327
    %v376 = vpack.c.bf16 %v330, %v329
    %v377 = vpack.c.bf16 %v332, %v331
    %v378 = vpack.c.bf16 %v334, %v333
    %v379 = vpack.c.bf16 %v336, %v335
    %v380 = vpack.c.bf16 %v338, %v337
    %v381 = vpack.c.bf16 %v340, %v339
    %v382 = vpack.c.bf16 %v342, %v341
    %v383 = vpack.c.bf16 %v344, %v343
    %v384 = vpack.c.bf16 %v346, %v345
    %v385 = vpack.c.bf16 %v348, %v347
    %v386 = vpack.c.bf16 %v350, %v349
    %v387 = vpack.c.bf16 %v352, %v351
    %v388 = vpack.c.bf16 %v354, %v353
    %v389 = vpack.c.bf16 %v356, %v355
    %v390 = vpack.c.bf16 %v358, %v357
    %v391 = vld [vmem:[%s6] sm:$0xf]
    %v392 = vld [vmem:[%s6 + $0x4] sm:$0xf]
    %v393 = vld [vmem:[%s6 + $0x8] sm:$0xf]
    %v394 = vld [vmem:[%s6 + $0xc] sm:$0xf]
    %v395 = vld [vmem:[%s7] sm:$0x1]
    %v397 = vlaneseq
    %v398 = vshrl.u32 %v397, 7
    %v399 = vsub.s32 0, %v398
    %v400 = vrot.slane %v395, %v399
    %v406 = vunpack.c.l.b16 %v391
    %v407 = vunpack.c.l.b16 %v392
    %v408 = vunpack.c.l.b16 %v393
    %v409 = vunpack.c.l.b16 %v394
    %v410 = vpack.c.b16 %v407, %v406
    %v411 = vpack.c.b16 %v409, %v408
    %vm414 = vcmask 261120
    %v416 = vsel %vm414, %v359, 0
    %v419 = vsel %vm414, %v360, 0
    %v422 = vsel %vm414, %v361, 0
    %v425 = vsel %vm414, %v362, 0
    %v428 = vsel %vm414, %v363, 0
    %v431 = vsel %vm414, %v364, 0
    %v434 = vsel %vm414, %v365, 0
    %v437 = vsel %vm414, %v366, 0
    %v440 = vsel %vm414, %v367, 0
    %v443 = vsel %vm414, %v368, 0
    %v446 = vsel %vm414, %v369, 0
    %v449 = vsel %vm414, %v370, 0
    %v452 = vsel %vm414, %v371, 0
    %v455 = vsel %vm414, %v372, 0
    %v458 = vsel %vm414, %v373, 0
    %v461 = vsel %vm414, %v374, 0
    %v464 = vsel %vm414, %v375, 0
    %v467 = vsel %vm414, %v376, 0
    %v470 = vsel %vm414, %v377, 0
    %v473 = vsel %vm414, %v378, 0
    %v476 = vsel %vm414, %v379, 0
    %v479 = vsel %vm414, %v380, 0
    %v482 = vsel %vm414, %v381, 0
    %v485 = vsel %vm414, %v382, 0
    %v488 = vsel %vm414, %v383, 0
    %v491 = vsel %vm414, %v384, 0
    %v494 = vsel %vm414, %v385, 0
    %v497 = vsel %vm414, %v386, 0
    %v500 = vsel %vm414, %v387, 0
    %v503 = vsel %vm414, %v388, 0
    %v506 = vsel %vm414, %v389, 0
    %v509 = vsel %vm414, %v390, 0
    %511 = vmatprep.subr.bf16.mxu0 0
    %512 = vmatpush1.bf16.msra.mxu0 %v410
    %513 = vmatprep.subr.bf16.mxu0 0
    %514 = vmatpush1.bf16.msra.mxu0 %v411
    %515 = vmatprep.subr.bf16.mxu0 0
    %516 = vmatpush1.bf16.msra.mxu0 0
    %517 = vmatprep.subr.bf16.mxu0 0
    %518 = vmatpush1.bf16.msra.mxu0 0
    %519 = vmatprep.subr.bf16.mxu0 0
    %520 = vmatpush1.bf16.msra.mxu0 0
    %521 = vmatprep.subr.bf16.mxu0 0
    %522 = vmatpush1.bf16.msra.mxu0 0
    %523 = vmatprep.subr.bf16.mxu0 0
    %524 = vmatpush1.bf16.msra.mxu0 0
    %525 = vmatprep.subr.bf16.mxu0 0
    %526 = vmatpush1.bf16.msra.mxu0 0
    %527 = vmatprep.subr.bf16.mxu0 0
    %528 = vmatpush1.bf16.msra.mxu0 0
    %529 = vmatprep.subr.bf16.mxu0 0
    %530 = vmatpush1.bf16.msra.mxu0 0
    %531 = vmatprep.subr.bf16.mxu0 0
    %532 = vmatpush1.bf16.msra.mxu0 0
    %533 = vmatprep.subr.bf16.mxu0 0
    %534 = vmatpush1.bf16.msra.mxu0 0
    %535 = vmatprep.subr.bf16.mxu0 0
    %536 = vmatpush1.bf16.msra.mxu0 0
    %537 = vmatprep.subr.bf16.mxu0 0
    %538 = vmatpush1.bf16.msra.mxu0 0
    %539 = vmatprep.subr.bf16.mxu0 0
    %540 = vmatpush1.bf16.msra.mxu0 0
    %541 = vmatprep.subr.bf16.mxu0 0
    %542 = vmatpush1.bf16.msra.mxu0 0
    %543 = vmatprep.mubr.bf16.mxu0 0
    %544 = vmatmul.mubr.bf16.gmra.mrb[0].mxu0 %v416
    %v545 = vpop.f32.mrb[0].mxu0
    %v546 = vadd.f32 %v400, %v545
    %v547 = vpop.f32.mrb[0].mxu0
    %v548 = vpop.f32.mrb[0].mxu0
    %v549 = vadd.f32 %v400, %v548
    %v550 = vpop.f32.mrb[0].mxu0
    %551 = vmatprep.mubr.bf16.mxu0 0
    %552 = vmatmul.mubr.bf16.gmra.mrb[0].mxu0 %v419
    %v553 = vpop.f32.mrb[0].mxu0
    %v554 = vadd.f32 %v400, %v553
    %v555 = vpop.f32.mrb[0].mxu0
    %v556 = vpop.f32.mrb[0].mxu0
    %v557 = vadd.f32 %v400, %v556
    %v558 = vpop.f32.mrb[0].mxu0
    %559 = vmatprep.mubr.bf16.mxu0 0
    %560 = vmatmul.mubr.bf16.gmra.mrb[0].mxu0 %v422
    %v561 = vpop.f32.mrb[0].mxu0
    %v562 = vadd.f32 %v400, %v561
    %v563 = vpop.f32.mrb[0].mxu0
    %v564 = vpop.f32.mrb[0].mxu0
    %v565 = vadd.f32 %v400, %v564
    %v566 = vpop.f32.mrb[0].mxu0
    %567 = vmatprep.mubr.bf16.mxu0 0
    %568 = vmatmul.mubr.bf16.gmra.mrb[0].mxu0 %v425
    %v569 = vpop.f32.mrb[0].mxu0
    %v570 = vadd.f32 %v400, %v569
    %v571 = vpop.f32.mrb[0].mxu0
    %v572 = vpop.f32.mrb[0].mxu0
    %v573 = vadd.f32 %v400, %v572
    %v574 = vpop.f32.mrb[0].mxu0
    %575 = vmatprep.mubr.bf16.mxu0 0
    %576 = vmatmul.mubr.bf16.gmra.mrb[0].mxu0 %v428
    %v577 = vpop.f32.mrb[0].mxu0
    %v578 = vadd.f32 %v400, %v577
    %v579 = vpop.f32.mrb[0].mxu0
    %v580 = vpop.f32.mrb[0].mxu0
    %v581 = vadd.f32 %v400, %v580
    %v582 = vpop.f32.mrb[0].mxu0
    %583 = vmatprep.mubr.bf16.mxu0 0
    %584 = vmatmul.mubr.bf16.gmra.mrb[0].mxu0 %v431
    %v585 = vpop.f32.mrb[0].mxu0
    %v586 = vadd.f32 %v400, %v585
    %v587 = vpop.f32.mrb[0].mxu0
    %v588 = vpop.f32.mrb[0].mxu0
    %v589 = vadd.f32 %v400, %v588
    %v590 = vpop.f32.mrb[0].mxu0
    %591 = vmatprep.mubr.bf16.mxu0 0
    %592 = vmatmul.mubr.bf16.gmra.mrb[0].mxu0 %v434
    %v593 = vpop.f32.mrb[0].mxu0
    %v594 = vadd.f32 %v400, %v593
    %v595 = vpop.f32.mrb[0].mxu0
    %v596 = vpop.f32.mrb[0].mxu0
    %v597 = vadd.f32 %v400, %v596
    %v598 = vpop.f32.mrb[0].mxu0
    %599 = vmatprep.mubr.bf16.mxu0 0
    %600 = vmatmul.mubr.bf16.gmra.mrb[0].mxu0 %v437
    %v601 = vpop.f32.mrb[0].mxu0
    %v602 = vadd.f32 %v400, %v601
    %v603 = vpop.f32.mrb[0].mxu0
    %v604 = vpop.f32.mrb[0].mxu0
    %v605 = vadd.f32 %v400, %v604
    %v606 = vpop.f32.mrb[0].mxu0
    %607 = vmatprep.mubr.bf16.mxu0 0
    %608 = vmatmul.mubr.bf16.gmra.mrb[0].mxu0 %v440
    %v609 = vpop.f32.mrb[0].mxu0
    %v610 = vadd.f32 %v400, %v609
    %v611 = vpop.f32.mrb[0].mxu0
    %v612 = vpop.f32.mrb[0].mxu0
    %v613 = vadd.f32 %v400, %v612
    %v614 = vpop.f32.mrb[0].mxu0
    %615 = vmatprep.mubr.bf16.mxu0 0
    %616 = vmatmul.mubr.bf16.gmra.mrb[0].mxu0 %v443
    %v617 = vpop.f32.mrb[0].mxu0
    %v618 = vadd.f32 %v400, %v617
    %v619 = vpop.f32.mrb[0].mxu0
    %v620 = vpop.f32.mrb[0].mxu0
    %v621 = vadd.f32 %v400, %v620
    %v622 = vpop.f32.mrb[0].mxu0
    %623 = vmatprep.mubr.bf16.mxu0 0
    %624 = vmatmul.mubr.bf16.gmra.mrb[0].mxu0 %v446
    %v625 = vpop.f32.mrb[0].mxu0
    %v626 = vadd.f32 %v400, %v625
    %v627 = vpop.f32.mrb[0].mxu0
    %v628 = vpop.f32.mrb[0].mxu0
    %v629 = vadd.f32 %v400, %v628
    %v630 = vpop.f32.mrb[0].mxu0
    %631 = vmatprep.mubr.bf16.mxu0 0
    %632 = vmatmul.mubr.bf16.gmra.mrb[0].mxu0 %v449
    %v633 = vpop.f32.mrb[0].mxu0
    %v634 = vadd.f32 %v400, %v633
    %v635 = vpop.f32.mrb[0].mxu0
    %v636 = vpop.f32.mrb[0].mxu0
    %v637 = vadd.f32 %v400, %v636
    %v638 = vpop.f32.mrb[0].mxu0
    %639 = vmatprep.mubr.bf16.mxu0 0
    %640 = vmatmul.mubr.bf16.gmra.mrb[0].mxu0 %v452
    %v641 = vpop.f32.mrb[0].mxu0
    %v642 = vadd.f32 %v400, %v641
    %v643 = vpop.f32.mrb[0].mxu0
    %v644 = vpop.f32.mrb[0].mxu0
    %v645 = vadd.f32 %v400, %v644
    %v646 = vpop.f32.mrb[0].mxu0
    %647 = vmatprep.mubr.bf16.mxu0 0
    %648 = vmatmul.mubr.bf16.gmra.mrb[0].mxu0 %v455
    %v649 = vpop.f32.mrb[0].mxu0
    %v650 = vadd.f32 %v400, %v649
    %v651 = vpop.f32.mrb[0].mxu0
    %v652 = vpop.f32.mrb[0].mxu0
    %v653 = vadd.f32 %v400, %v652
    %v654 = vpop.f32.mrb[0].mxu0
    %655 = vmatprep.mubr.bf16.mxu0 0
    %656 = vmatmul.mubr.bf16.gmra.mrb[0].mxu0 %v458
    %v657 = vpop.f32.mrb[0].mxu0
    %v658 = vadd.f32 %v400, %v657
    %v659 = vpop.f32.mrb[0].mxu0
    %v660 = vpop.f32.mrb[0].mxu0
    %v661 = vadd.f32 %v400, %v660
    %v662 = vpop.f32.mrb[0].mxu0
    %663 = vmatprep.mubr.bf16.mxu0 0
    %664 = vmatmul.mubr.bf16.gmra.mrb[0].mxu0 %v461
    %v665 = vpop.f32.mrb[0].mxu0
    %v666 = vadd.f32 %v400, %v665
    %v667 = vpop.f32.mrb[0].mxu0
    %v668 = vpop.f32.mrb[0].mxu0
    %v669 = vadd.f32 %v400, %v668
    %v670 = vpop.f32.mrb[0].mxu0
    %671 = vmatprep.mubr.bf16.mxu0 0
    %672 = vmatmul.mubr.bf16.gmra.mrb[0].mxu0 %v464
    %v673 = vpop.f32.mrb[0].mxu0
    %v674 = vadd.f32 %v400, %v673
    %v675 = vpop.f32.mrb[0].mxu0
    %v676 = vpop.f32.mrb[0].mxu0
    %v677 = vadd.f32 %v400, %v676
    %v678 = vpop.f32.mrb[0].mxu0
    %679 = vmatprep.mubr.bf16.mxu0 0
    %680 = vmatmul.mubr.bf16.gmra.mrb[0].mxu0 %v467
    %v681 = vpop.f32.mrb[0].mxu0
    %v682 = vadd.f32 %v400, %v681
    %v683 = vpop.f32.mrb[0].mxu0
    %v684 = vpop.f32.mrb[0].mxu0
    %v685 = vadd.f32 %v400, %v684
    %v686 = vpop.f32.mrb[0].mxu0
    %687 = vmatprep.mubr.bf16.mxu0 0
    %688 = vmatmul.mubr.bf16.gmra.mrb[0].mxu0 %v470
    %v689 = vpop.f32.mrb[0].mxu0
    %v690 = vadd.f32 %v400, %v689
    %v691 = vpop.f32.mrb[0].mxu0
    %v692 = vpop.f32.mrb[0].mxu0
    %v693 = vadd.f32 %v400, %v692
    %v694 = vpop.f32.mrb[0].mxu0
    %695 = vmatprep.mubr.bf16.mxu0 0
    %696 = vmatmul.mubr.bf16.gmra.mrb[0].mxu0 %v473
    %v697 = vpop.f32.mrb[0].mxu0
    %v698 = vadd.f32 %v400, %v697
    %v699 = vpop.f32.mrb[0].mxu0
    %v700 = vpop.f32.mrb[0].mxu0
    %v701 = vadd.f32 %v400, %v700
    %v702 = vpop.f32.mrb[0].mxu0
    %703 = vmatprep.mubr.bf16.mxu0 0
    %704 = vmatmul.mubr.bf16.gmra.mrb[0].mxu0 %v476
    %v705 = vpop.f32.mrb[0].mxu0
    %v706 = vadd.f32 %v400, %v705
    %v707 = vpop.f32.mrb[0].mxu0
    %v708 = vpop.f32.mrb[0].mxu0
    %v709 = vadd.f32 %v400, %v708
    %v710 = vpop.f32.mrb[0].mxu0
    %711 = vmatprep.mubr.bf16.mxu0 0
    %712 = vmatmul.mubr.bf16.gmra.mrb[0].mxu0 %v479
    %v713 = vpop.f32.mrb[0].mxu0
    %v714 = vadd.f32 %v400, %v713
    %v715 = vpop.f32.mrb[0].mxu0
    %v716 = vpop.f32.mrb[0].mxu0
    %v717 = vadd.f32 %v400, %v716
    %v718 = vpop.f32.mrb[0].mxu0
    %719 = vmatprep.mubr.bf16.mxu0 0
    %720 = vmatmul.mubr.bf16.gmra.mrb[0].mxu0 %v482
    %v721 = vpop.f32.mrb[0].mxu0
    %v722 = vadd.f32 %v400, %v721
    %v723 = vpop.f32.mrb[0].mxu0
    %v724 = vpop.f32.mrb[0].mxu0
    %v725 = vadd.f32 %v400, %v724
    %v726 = vpop.f32.mrb[0].mxu0
    %727 = vmatprep.mubr.bf16.mxu0 0
    %728 = vmatmul.mubr.bf16.gmra.mrb[0].mxu0 %v485
    %v729 = vpop.f32.mrb[0].mxu0
    %v730 = vadd.f32 %v400, %v729
    %v731 = vpop.f32.mrb[0].mxu0
    %v732 = vpop.f32.mrb[0].mxu0
    %v733 = vadd.f32 %v400, %v732
    %v734 = vpop.f32.mrb[0].mxu0
    %735 = vmatprep.mubr.bf16.mxu0 0
    %736 = vmatmul.mubr.bf16.gmra.mrb[0].mxu0 %v488
    %v737 = vpop.f32.mrb[0].mxu0
    %v738 = vadd.f32 %v400, %v737
    %v739 = vpop.f32.mrb[0].mxu0
    %v740 = vpop.f32.mrb[0].mxu0
    %v741 = vadd.f32 %v400, %v740
    %v742 = vpop.f32.mrb[0].mxu0
    %743 = vmatprep.mubr.bf16.mxu0 0
    %744 = vmatmul.mubr.bf16.gmra.mrb[0].mxu0 %v491
    %v745 = vpop.f32.mrb[0].mxu0
    %v746 = vadd.f32 %v400, %v745
    %v747 = vpop.f32.mrb[0].mxu0
    %v748 = vpop.f32.mrb[0].mxu0
    %v749 = vadd.f32 %v400, %v748
    %v750 = vpop.f32.mrb[0].mxu0
    %751 = vmatprep.mubr.bf16.mxu0 0
    %752 = vmatmul.mubr.bf16.gmra.mrb[0].mxu0 %v494
    %v753 = vpop.f32.mrb[0].mxu0
    %v754 = vadd.f32 %v400, %v753
    %v755 = vpop.f32.mrb[0].mxu0
    %v756 = vpop.f32.mrb[0].mxu0
    %v757 = vadd.f32 %v400, %v756
    %v758 = vpop.f32.mrb[0].mxu0
    %759 = vmatprep.mubr.bf16.mxu0 0
    %760 = vmatmul.mubr.bf16.gmra.mrb[0].mxu0 %v497
    %v761 = vpop.f32.mrb[0].mxu0
    %v762 = vadd.f32 %v400, %v761
    %v763 = vpop.f32.mrb[0].mxu0
    %v764 = vpop.f32.mrb[0].mxu0
    %v765 = vadd.f32 %v400, %v764
    %v766 = vpop.f32.mrb[0].mxu0
    %767 = vmatprep.mubr.bf16.mxu0 0
    %768 = vmatmul.mubr.bf16.gmra.mrb[0].mxu0 %v500
    %v769 = vpop.f32.mrb[0].mxu0
    %v770 = vadd.f32 %v400, %v769
    %v771 = vpop.f32.mrb[0].mxu0
    %v772 = vpop.f32.mrb[0].mxu0
    %v773 = vadd.f32 %v400, %v772
    %v774 = vpop.f32.mrb[0].mxu0
    %775 = vmatprep.mubr.bf16.mxu0 0
    %776 = vmatmul.mubr.bf16.gmra.mrb[0].mxu0 %v503
    %v777 = vpop.f32.mrb[0].mxu0
    %v778 = vadd.f32 %v400, %v777
    %v779 = vpop.f32.mrb[0].mxu0
    %v780 = vpop.f32.mrb[0].mxu0
    %v781 = vadd.f32 %v400, %v780
    %v782 = vpop.f32.mrb[0].mxu0
    %783 = vmatprep.mubr.bf16.mxu0 0
    %784 = vmatmul.mubr.bf16.gmra.mrb[0].mxu0 %v506
    %v785 = vpop.f32.mrb[0].mxu0
    %v786 = vadd.f32 %v400, %v785
    %v787 = vpop.f32.mrb[0].mxu0
    %v788 = vpop.f32.mrb[0].mxu0
    %v789 = vadd.f32 %v400, %v788
    %v790 = vpop.f32.mrb[0].mxu0
    %791 = vmatprep.mubr.bf16.mxu0 0
    %792 = vmatmul.mubr.bf16.gmra.mrb[0].mxu0 %v509
    %v793 = vpop.f32.mrb[0].mxu0
    %v794 = vadd.f32 %v400, %v793
    %v795 = vpop.f32.mrb[0].mxu0
    %v796 = vpop.f32.mrb[0].mxu0
    %v797 = vadd.f32 %v400, %v796
    %v798 = vpop.f32.mrb[0].mxu0
    %799 = vdwg.mxu0
    %v800 = vmax.f32 %v546, 0.0
    %v801 = vmax.f32 %v549, 0.0
    %v802 = vmax.f32 %v554, 0.0
    %v803 = vmax.f32 %v557, 0.0
    %v804 = vmax.f32 %v562, 0.0
    %v805 = vmax.f32 %v565, 0.0
    %v806 = vmax.f32 %v570, 0.0
    %v807 = vmax.f32 %v573, 0.0
    %v808 = vmax.f32 %v578, 0.0
    %v809 = vmax.f32 %v581, 0.0
    %v810 = vmax.f32 %v586, 0.0
    %v811 = vmax.f32 %v589, 0.0
    %v812 = vmax.f32 %v594, 0.0
    %v813 = vmax.f32 %v597, 0.0
    %v814 = vmax.f32 %v602, 0.0
    %v815 = vmax.f32 %v605, 0.0
    %v816 = vmax.f32 %v610, 0.0
    %v817 = vmax.f32 %v613, 0.0
    %v818 = vmax.f32 %v618, 0.0
    %v819 = vmax.f32 %v621, 0.0
    %v820 = vmax.f32 %v626, 0.0
    %v821 = vmax.f32 %v629, 0.0
    %v822 = vmax.f32 %v634, 0.0
    %v823 = vmax.f32 %v637, 0.0
    %v824 = vmax.f32 %v642, 0.0
    %v825 = vmax.f32 %v645, 0.0
    %v826 = vmax.f32 %v650, 0.0
    %v827 = vmax.f32 %v653, 0.0
    %v828 = vmax.f32 %v658, 0.0
    %v829 = vmax.f32 %v661, 0.0
    %v830 = vmax.f32 %v666, 0.0
    %v831 = vmax.f32 %v669, 0.0
    %v832 = vmax.f32 %v674, 0.0
    %v833 = vmax.f32 %v677, 0.0
    %v834 = vmax.f32 %v682, 0.0
    %v835 = vmax.f32 %v685, 0.0
    %v836 = vmax.f32 %v690, 0.0
    %v837 = vmax.f32 %v693, 0.0
    %v838 = vmax.f32 %v698, 0.0
    %v839 = vmax.f32 %v701, 0.0
    %v840 = vmax.f32 %v706, 0.0
    %v841 = vmax.f32 %v709, 0.0
    %v842 = vmax.f32 %v714, 0.0
    %v843 = vmax.f32 %v717, 0.0
    %v844 = vmax.f32 %v722, 0.0
    %v845 = vmax.f32 %v725, 0.0
    %v846 = vmax.f32 %v730, 0.0
    %v847 = vmax.f32 %v733, 0.0
    %v848 = vmax.f32 %v738, 0.0
    %v849 = vmax.f32 %v741, 0.0
    %v850 = vmax.f32 %v746, 0.0
    %v851 = vmax.f32 %v749, 0.0
    %v852 = vmax.f32 %v754, 0.0
    %v853 = vmax.f32 %v757, 0.0
    %v854 = vmax.f32 %v762, 0.0
    %v855 = vmax.f32 %v765, 0.0
    %v856 = vmax.f32 %v770, 0.0
    %v857 = vmax.f32 %v773, 0.0
    %v858 = vmax.f32 %v778, 0.0
    %v859 = vmax.f32 %v781, 0.0
    %v860 = vmax.f32 %v786, 0.0
    %v861 = vmax.f32 %v789, 0.0
    %v862 = vmax.f32 %v794, 0.0
    %v863 = vmax.f32 %v797, 0.0
    %v864 = vadd.f32 %v800, %v801
    %v865 = vadd.f32 %v864, %v802
    %v866 = vadd.f32 %v865, %v803
    %v867 = vadd.f32 %v866, %v804
    %v868 = vadd.f32 %v867, %v805
    %v869 = vadd.f32 %v868, %v806
    %v870 = vadd.f32 %v869, %v807
    %v871 = vadd.f32 %v870, %v808
    %v872 = vadd.f32 %v871, %v809
    %v873 = vadd.f32 %v872, %v810
    %v874 = vadd.f32 %v873, %v811
    %v875 = vadd.f32 %v874, %v812
    %v876 = vadd.f32 %v875, %v813
    %v877 = vadd.f32 %v876, %v814
    %v878 = vadd.f32 %v877, %v815
    %v879 = vadd.f32 %v878, %v816
    %v880 = vadd.f32 %v879, %v817
    %v881 = vadd.f32 %v880, %v818
    %v882 = vadd.f32 %v881, %v819
    %v883 = vadd.f32 %v882, %v820
    %v884 = vadd.f32 %v883, %v821
    %v885 = vadd.f32 %v884, %v822
    %v886 = vadd.f32 %v885, %v823
    %v887 = vadd.f32 %v886, %v824
    %v888 = vadd.f32 %v887, %v825
    %v889 = vadd.f32 %v888, %v826
    %v890 = vadd.f32 %v889, %v827
    %v891 = vadd.f32 %v890, %v828
    %v892 = vadd.f32 %v891, %v829
    %v893 = vadd.f32 %v892, %v830
    %v894 = vadd.f32 %v893, %v831
    %v895 = vrot.slane %v894, 4
    %v896 = vadd.f32 %v894, %v895
    %v897 = vrot.slane %v896, 2
    %v898 = vadd.f32 %v896, %v897
    %v899 = vrot.slane %v898, 1
    %v900 = vadd.f32 %v898, %v899
    %v901 = vadd.f32 %v832, %v833
    %v902 = vadd.f32 %v901, %v834
    %v903 = vadd.f32 %v902, %v835
    %v904 = vadd.f32 %v903, %v836
    %v905 = vadd.f32 %v904, %v837
    %v906 = vadd.f32 %v905, %v838
    %v907 = vadd.f32 %v906, %v839
    %v908 = vadd.f32 %v907, %v840
    %v909 = vadd.f32 %v908, %v841
    %v910 = vadd.f32 %v909, %v842
    %v911 = vadd.f32 %v910, %v843
    %v912 = vadd.f32 %v911, %v844
    %v913 = vadd.f32 %v912, %v845
    %v914 = vadd.f32 %v913, %v846
    %v915 = vadd.f32 %v914, %v847
    %v916 = vadd.f32 %v915, %v848
    %v917 = vadd.f32 %v916, %v849
    %v918 = vadd.f32 %v917, %v850
    %v919 = vadd.f32 %v918, %v851
    %v920 = vadd.f32 %v919, %v852
    %v921 = vadd.f32 %v920, %v853
    %v922 = vadd.f32 %v921, %v854
    %v923 = vadd.f32 %v922, %v855
    %v924 = vadd.f32 %v923, %v856
    %v925 = vadd.f32 %v924, %v857
    %v926 = vadd.f32 %v925, %v858
    %v927 = vadd.f32 %v926, %v859
    %v928 = vadd.f32 %v927, %v860
    %v929 = vadd.f32 %v928, %v861
    %v930 = vadd.f32 %v929, %v862
    %v931 = vadd.f32 %v930, %v863
    %v932 = vrot.slane %v931, 4
    %v933 = vadd.f32 %v931, %v932
    %v934 = vrot.slane %v933, 2
    %v935 = vadd.f32 %v933, %v934
    %v936 = vrot.slane %v935, 1
    %v937 = vadd.f32 %v935, %v936
    %v938 = vmul.f32 %v900, 0.00390625
    %v939 = vmul.f32 %v937, 0.00390625
    %v940 = vpack.c.bf16 %v938, %v938
    %v941 = vpack.c.bf16 %v939, %v939
    %v942 = vld [vmem:[%s8] sm:$0xf]
    %v943 = vld [vmem:[%s8 + $0x4] sm:$0xf]
    %v944 = vld [vmem:[%s8 + $0x8] sm:$0xf]
    %v945 = vld [vmem:[%s8 + $0xc] sm:$0xf]
    %v946 = vld [vmem:[%s8 + $0x10] sm:$0xf]
    %v947 = vld [vmem:[%s8 + $0x14] sm:$0xf]
    %v948 = vld [vmem:[%s8 + $0x18] sm:$0xf]
    %v949 = vld [vmem:[%s8 + $0x1c] sm:$0xf]
    %v950 = vld [vmem:[%s8 + $0x20] sm:$0xf]
    %v951 = vld [vmem:[%s8 + $0x24] sm:$0xf]
    %v952 = vld [vmem:[%s8 + $0x28] sm:$0xf]
    %v953 = vld [vmem:[%s8 + $0x2c] sm:$0xf]
    %v954 = vld [vmem:[%s8 + $0x30] sm:$0xf]
    %v955 = vld [vmem:[%s8 + $0x34] sm:$0xf]
    %v956 = vld [vmem:[%s8 + $0x38] sm:$0xf]
    %v957 = vld [vmem:[%s8 + $0x3c] sm:$0xf]
    %v958 = vld [vmem:[%s9] sm:$0x1]
    %v960 = vlaneseq
    %v961 = vshrl.u32 %v960, 7
    %v962 = vsub.s32 0, %v961
    %v963 = vrot.slane %v958, %v962
    %v967 = vunpack.c.l.b16 %v940
    %v968 = vunpack.c.l.b16 %v941
    %vm969 = vcmask 1041409
    %v970 = vsel %vm969, %v968, %v967
    %v971 = vpack.c.b16 %v970, %v970
    %v989 = vunpack.c.l.b16 %v942
    %v990 = vunpack.c.l.b16 %v943
    %v991 = vunpack.c.l.b16 %v944
    %v992 = vunpack.c.l.b16 %v945
    %v993 = vunpack.c.l.b16 %v946
    %v994 = vunpack.c.l.b16 %v947
    %v995 = vunpack.c.l.b16 %v948
    %v996 = vunpack.c.l.b16 %v949
    %v997 = vunpack.c.l.b16 %v950
    %v998 = vunpack.c.l.b16 %v951
    %v999 = vunpack.c.l.b16 %v952
    %v1000 = vunpack.c.l.b16 %v953
    %v1001 = vunpack.c.l.b16 %v954
    %v1002 = vunpack.c.l.b16 %v955
    %v1003 = vunpack.c.l.b16 %v956
    %v1004 = vunpack.c.l.b16 %v957
    %v1005 = vpack.c.b16 %v990, %v989
    %v1006 = vpack.c.b16 %v992, %v991
    %v1007 = vpack.c.b16 %v994, %v993
    %v1008 = vpack.c.b16 %v996, %v995
    %v1009 = vpack.c.b16 %v998, %v997
    %v1010 = vpack.c.b16 %v1000, %v999
    %v1011 = vpack.c.b16 %v1002, %v1001
    %v1012 = vpack.c.b16 %v1004, %v1003
    %1021 = vmatprep.subr.bf16.mxu0 0
    %1022 = vmatpush1.bf16.msra.mxu0 %v1005
    %1023 = vmatprep.subr.bf16.mxu0 0
    %1024 = vmatpush1.bf16.msra.mxu0 %v1006
    %1025 = vmatprep.subr.bf16.mxu0 0
    %1026 = vmatpush1.bf16.msra.mxu0 %v1007
    %1027 = vmatprep.subr.bf16.mxu0 0
    %1028 = vmatpush1.bf16.msra.mxu0 %v1008
    %1029 = vmatprep.subr.bf16.mxu0 0
    %1030 = vmatpush1.bf16.msra.mxu0 %v1009
    %1031 = vmatprep.subr.bf16.mxu0 0
    %1032 = vmatpush1.bf16.msra.mxu0 %v1010
    %1033 = vmatprep.subr.bf16.mxu0 0
    %1034 = vmatpush1.bf16.msra.mxu0 %v1011
    %1035 = vmatprep.subr.bf16.mxu0 0
    %1036 = vmatpush1.bf16.msra.mxu0 %v1012
    %1037 = vmatprep.subr.bf16.mxu0 0
    %1038 = vmatpush1.bf16.msra.mxu0 0
    %1039 = vmatprep.subr.bf16.mxu0 0
    %1040 = vmatpush1.bf16.msra.mxu0 0
    %1041 = vmatprep.subr.bf16.mxu0 0
    %1042 = vmatpush1.bf16.msra.mxu0 0
    %1043 = vmatprep.subr.bf16.mxu0 0
    %1044 = vmatpush1.bf16.msra.mxu0 0
    %1045 = vmatprep.subr.bf16.mxu0 0
    %1046 = vmatpush1.bf16.msra.mxu0 0
    %1047 = vmatprep.subr.bf16.mxu0 0
    %1048 = vmatpush1.bf16.msra.mxu0 0
    %1049 = vmatprep.subr.bf16.mxu0 0
    %1050 = vmatpush1.bf16.msra.mxu0 0
    %1051 = vmatprep.subr.bf16.mxu0 0
    %1052 = vmatpush1.bf16.msra.mxu0 0
    %1053 = vmatprep.mubr.bf16.mxu0 0
    %1054 = vmatmul.mubr.bf16.gmra.mrb[0].mxu0 %v971
    %v1055 = vpop.f32.mrb[0].mxu0
    %v1056 = vadd.f32 %v963, %v1055
    %v1057 = vpop.f32.mrb[0].mxu0
    %v1058 = vpop.f32.mrb[0].mxu0
    %v1059 = vpop.f32.mrb[0].mxu0
    %1060 = vdwg.mxu0
    %1061 = vst [vmem:[#allocation2] sm:$0x3] %v1056
    // Predicated region
    $region42: #{generate.1} parent=1 // pred_check
      _
    $region43: #{generate.1} parent=1 // pred_check_branch
      %1063 = sbr.rel (0) target = $region45
    $region44: #{generate.1} parent=1 // pred_region
      _
    $region45: #{generate.1} parent=1 // pred_fallthru
      _
    // Predicated region
    $region46: #{generate.1} parent=1 // pred_check
      _
    $region47: #{generate.1} parent=1 // pred_check_branch
      %1065 = sbr.rel (0) target = $region49
    $region48: #{generate.1} parent=1 // pred_region
      %s1067 = ssub.s32 32, 32
      %1068 = vsyncadd [#allocation3], %s1067
      %s1070 = sshll.u32 [#allocation2], 4
      %s1071 = int_to_ptr.vmem [resolvable:$true] %s1070
      %1073 = dma.vmem_to_hbm [thread:$0]  %s1071, 32, %s11, [#allocation3]
    $region49: #{generate.1} parent=1 // pred_fallthru
      _
    // Predicated region
    $region50: #{generate.1} parent=1 // pred_check
      _
    $region51: #{generate.1} parent=1 // pred_check_branch
      %1075 = sbr.rel (0) target = $region53
    $region52: #{generate.1} parent=1 // pred_region
      _
    $region53: #{generate.1} parent=1 // pred_fallthru
      _
    // Predicated region
    $region54: #{generate.1} parent=1 // pred_check
      _
    $region55: #{generate.1} parent=1 // pred_check_branch
      %1077 = sbr.rel (0) target = $region57
    $region56: #{generate.1} parent=1 // pred_region
      %1078 = dma.done [#allocation3], 32
    $region57: #{generate.1} parent=1 // pred_fallthru
      _
    %1079 = vsyncpa [#allocation3], 1

</llo_original>
